<compile_context>
chip_gen: v5e
topology: v5e:2x2
jax: 0.10.0
libtpu: 0.0.40
codegen_flags: <defaults>
</compile_context>

<pallas_src>
import functools

import jax
import jax.numpy as jnp
from jax.experimental import pallas as pl
from jax.experimental.pallas import tpu as pltpu


def _round_up(x, m):
    return ((x + m - 1) // m) * m


# --------------------------------------------------------------------------- #
# Kernel
# --------------------------------------------------------------------------- #
def actor_critic_kernel(
    state_ref,          # (TB, S)   f32 or bf16
    w1_ref, b1_ref,     # (S, H) bf16, (1, H) f32        feature_layer
    wh_ref, bh_ref,     # (H, 2H) bf16, (1, 2H) f32      fused actor/critic hidden
    whd_ref, bhd_ref,   # (2H, P) bf16, (1, P) f32       fused block-diagonal heads
    out_ref,            # (TB, P)   packed: [:, :A] softmax mean, [:, A] value
    *,
    action_dim,
):
    cdt = w1_ref.dtype                       # compute dtype for MXU operands (bf16)

    # feature_layer: Linear + ReLU (f32 accumulation)
    x = state_ref[...].astype(cdt)
    f = jnp.dot(x, w1_ref[...], preferred_element_type=jnp.float32) + b1_ref[...]
    f = jnp.maximum(f, 0.0)

    # fused actor/critic hidden: one (H, 2H) matmul, cols [:H]=actor, [H:]=critic
    h = jnp.dot(f.astype(cdt), wh_ref[...],
                preferred_element_type=jnp.float32) + bh_ref[...]
    h = jnp.maximum(h, 0.0)

    # fused heads: block-diagonal weight -> (TB, P):
    #   cols [0, A) actor logits, col A critic value, cols (A, P) exact zeros
    head = jnp.dot(h.astype(cdt), whd_ref[...],
                   preferred_element_type=jnp.float32) + bhd_ref[...]

    # masked softmax over the action columns only (exact division: the mean feeds
    # a probability distribution, rows must sum to 1)
    col = jax.lax.broadcasted_iota(jnp.int32, head.shape, 1)
    is_act = col < action_dim
    masked = jnp.where(is_act, head, -jnp.inf)
    m = jnp.max(masked, axis=-1, keepdims=True)
    e = jnp.exp(masked - m)                  # zeros outside action cols
    denom = jnp.sum(e, axis=-1, keepdims=True)
    mean = e / denom

    # pack lane-dense: value at column A, softmax mean (or zeros) elsewhere
    packed = jnp.where(col == action_dim, head, mean)
    out_ref[...] = packed.astype(out_ref.dtype)


# --------------------------------------------------------------------------- #
# One-time parameter preparation (fusion + dtype cast)
# --------------------------------------------------------------------------- #
def prepare_params(params, *, compute_dtype=jnp.bfloat16):
    """Fuse the actor/critic weights once (do NOT redo this per forward call)."""
    H = params["wa1"].shape[0]
    A = params["wa2"].shape[1]
    P = max(128, _round_up(A + 1, 128))      # lane-padded packed-output width

    # fused hidden: [wa1 | wc1] -> (H, 2H)
    w_h = jnp.concatenate([params["wa1"], params["wc1"]], axis=1)
    b_h = jnp.concatenate([params["ba1"], params["bc1"]], axis=1)

    # fused heads: block-diagonal (2H, P); rows [:H] -> actor logit cols [:A],
    # rows [H:] -> critic value col A; remaining cols zero.
    w_head = jnp.zeros((2 * H, P), jnp.float32)
    w_head = w_head.at[:H, :A].set(params["wa2"])
    w_head = w_head.at[H:, A].set(params["wc2"][:, 0])
    b_head = jnp.zeros((1, P), jnp.float32)
    b_head = b_head.at[0, :A].set(params["ba2"][0])
    b_head = b_head.at[0, A].set(params["bc2"][0, 0])

    return dict(
        w1=params["w1"].astype(compute_dtype),
        b1=params["b1"].astype(jnp.float32),       # biases add to f32 accumulator
        w_h=w_h.astype(compute_dtype),
        b_h=b_h.astype(jnp.float32),
        w_head=w_head.astype(compute_dtype),
        b_head=b_head.astype(jnp.float32),
        log_std=params["log_std"].astype(jnp.float32),
    )


# --------------------------------------------------------------------------- #
# Forward wrapper (run under jax.jit so output slices fuse with the kernel)
# --------------------------------------------------------------------------- #
def actor_critic_forward(state, prepared, *, batch_tile=None,
                         out_dtype=jnp.bfloat16, vmem_limit_bytes=None):
    B, S = state.shape
    H = prepared["w1"].shape[1]
    A = prepared["log_std"].shape[1]
    P = prepared["w_head"].shape[1]

    # Pad the batch to a multiple of 16 (bf16 sublane-packing granularity); the
    # padded rows are zeros and are sliced away below.
    SUB = 16
    Bp = max(SUB, _round_up(B, SUB))
    x = state if Bp == B else jnp.pad(state, ((0, Bp - B), (0, 0)))

    # Batch tile: default 2048 rows (~3.2 KiB/row), well under every generation's
    # scoped-VMEM limit; cap so the grid has >= 2 parallel steps when the batch is
    # large enough (v7x has 2 TensorCores).
    if batch_tile is None:
        batch_tile = 2048
    TB = min(_round_up(batch_tile, SUB), Bp)
    if Bp >= 2 * SUB:
        TB = min(TB, _round_up(pl.cdiv(Bp, 2), SUB))
    nb = pl.cdiv(Bp, TB)

    # Scoped-VMEM estimate: double-buffered batch-tiled streams + resident weights
    # + f32 temporaries.  Only raise the limit when the v5e 16 MiB default would be
    # exceeded; stay under v7x's 64 MiB physical VMEM.
    in_isz = jnp.dtype(x.dtype).itemsize
    out_isz = jnp.dtype(out_dtype).itemsize
    weight_bytes = sum(prepared[k].size * prepared[k].dtype.itemsize
                       for k in ("w1", "b1", "w_h", "b_h", "w_head", "b_head"))
    est = (2 * TB * (S * in_isz + P * out_isz)
           + 2 * weight_bytes
           + TB * (3 * H + 2 * P) * 4)
    vmem_limit = vmem_limit_bytes
    if vmem_limit is None and est > 12 * 1024 * 1024:
        vmem_limit = min(2 * est, 56 * 1024 * 1024)

    def wspec(shape):
        return pl.BlockSpec(shape, lambda i: (0, 0))   # VMEM-resident weights

    grid_spec = pltpu.PrefetchScalarGridSpec(
        num_scalar_prefetch=0,
        grid=(nb,),
        in_specs=[
            pl.BlockSpec((TB, S), lambda i: (i, 0)),   # state tiles pipeline
            wspec((S, H)), wspec((1, H)),
            wspec((H, 2 * H)), wspec((1, 2 * H)),
            wspec((2 * H, P)), wspec((1, P)),
        ],
        out_specs=pl.BlockSpec((TB, P), lambda i: (i, 0)),
    )

    packed = pl.pallas_call(
        functools.partial(actor_critic_kernel, action_dim=A),
        out_shape=jax.ShapeDtypeStruct((Bp, P), out_dtype),
        grid_spec=grid_spec,
        compiler_params=pltpu.CompilerParams(
            dimension_semantics=("parallel",),          # 2-TC sharding on v7x
            vmem_limit_bytes=vmem_limit,
        ),
    )(x, prepared["w1"], prepared["b1"], prepared["w_h"], prepared["b_h"],
      prepared["w_head"], prepared["b_head"])

    # Slices/upcasts fuse into the surrounding jit (avoid standalone re-reads of
    # the padded packed buffer).
    action_mean = packed[:B, :A].astype(jnp.float32)
    state_value = packed[:B, A:A + 1].astype(jnp.float32)
    # action_std = exp(log_std) is state-independent: computed outside the kernel.
    action_std = jnp.broadcast_to(jnp.exp(prepared["log_std"]), (B, A))
    return action_mean, action_std, state_value


# --------------------------------------------------------------------------- #
# Init + reference
# --------------------------------------------------------------------------- #
def init_params(key, state_dim, action_dim, hidden_dim):
    """Deterministic init mimicking PyTorch Linear default (uniform ±1/sqrt(fan_in)).
    Weights stored as (in_features, out_features)."""
    def linear(key, fan_in, fan_out):
        kw, kb = jax.random.split(key)
        bound = 1.0 / jnp.sqrt(fan_in)
        w = jax.random.uniform(kw, (fan_in, fan_out), jnp.float32, -bound, bound)
        b = jax.random.uniform(kb, (1, fan_out), jnp.float32, -bound, bound)
        return w, b

    keys = jax.random.split(key, 5)
    w1, b1 = linear(keys[0], state_dim, hidden_dim)
    wa1, ba1 = linear(keys[1], hidden_dim, hidden_dim)
    wa2, ba2 = linear(keys[2], hidden_dim, action_dim)
    wc1, bc1 = linear(keys[3], hidden_dim, hidden_dim)
    wc2, bc2 = linear(keys[4], hidden_dim, 1)
    log_std = jnp.zeros((1, action_dim), jnp.float32)
    return dict(w1=w1, b1=b1, wa1=wa1, ba1=ba1, wa2=wa2, ba2=ba2,
                wc1=wc1, bc1=bc1, wc2=wc2, bc2=bc2, log_std=log_std)


def reference_forward(state, p, compute_dtype=jnp.bfloat16):
    """Pure-JAX reference using the same bf16-operand / f32-accumulate recipe."""
    cd, f32 = compute_dtype, jnp.float32
    x = state.astype(cd)
    f = jax.nn.relu(jnp.dot(x, p["w1"].astype(cd), preferred_element_type=f32) + p["b1"])
    ha = jax.nn.relu(jnp.dot(f.astype(cd), p["wa1"].astype(cd),
                             preferred_element_type=f32) + p["ba1"])
    logits = jnp.dot(ha.astype(cd), p["wa2"].astype(cd),
                     preferred_element_type=f32) + p["ba2"]
    mean = jax.nn.softmax(logits, axis=-1)
    hc = jax.nn.relu(jnp.dot(f.astype(cd), p["wc1"].astype(cd),
                             preferred_element_type=f32) + p["bc1"])
    v = jnp.dot(hc.astype(cd), p["wc2"].astype(cd),
                preferred_element_type=f32) + p["bc2"]
    std = jnp.broadcast_to(jnp.exp(p["log_std"]), mean.shape)
    return mean, std, v


# --------------------------------------------------------------------------- #
# Demo / self-test
# --------------------------------------------------------------------------- #
if __name__ == "__main__":
    B, STATE_DIM, ACTION_DIM, HIDDEN_DIM = 8, 16, 4, 128

    key = jax.random.PRNGKey(0)
    k_state, k_params = jax.random.split(key)
    state = jax.random.normal(k_state, (B, STATE_DIM), jnp.float32)
    params = init_params(k_params, STATE_DIM, ACTION_DIM, HIDDEN_DIM)

    # One-time weight fusion / bf16 cast (not per-step work).
    prepared = prepare_params(params)

    fwd = jax.jit(actor_critic_forward)
    mean, std, value = fwd(state, prepared)
    jax.block_until_ready((mean, std, value))

    # sanity check against a pure-JAX reference (same bf16 weights / bf16 output
    # rounding accounts for the tolerances)
    ref_mean, ref_std, ref_value = reference_forward(state, params)
    assert mean.shape == (B, ACTION_DIM)
    assert value.shape == (B, 1)
    assert std.shape == (B, ACTION_DIM)
    assert bool(jnp.all(jnp.isfinite(mean))) and bool(jnp.all(jnp.isfinite(value)))
    assert jnp.allclose(mean, ref_mean, atol=2e-3, rtol=1e-2)
    assert jnp.allclose(value, ref_value, atol=2e-3, rtol=1e-2)
    assert jnp.allclose(std, ref_std, atol=1e-5, rtol=1e-5)
    # softmax uses exact division; only bf16 output rounding perturbs the row sums
    assert jnp.allclose(jnp.sum(mean, axis=-1), 1.0, atol=1e-2)

    print("KERNEL_OK")
</pallas_src>

<mosaic_0001>
module attributes {stable_mosaic.version = 11 : i64} {
  func.func @actor_critic_kernel(%arg0: i32, %arg1: memref<16x16xf32, #tpu.memory_space<vmem>>, %arg2: memref<16x128xbf16, #tpu.memory_space<vmem>>, %arg3: memref<1x128xf32, #tpu.memory_space<vmem>>, %arg4: memref<128x256xbf16, #tpu.memory_space<vmem>>, %arg5: memref<1x256xf32, #tpu.memory_space<vmem>>, %arg6: memref<256x128xbf16, #tpu.memory_space<vmem>>, %arg7: memref<1x128xf32, #tpu.memory_space<vmem>>, %arg8: memref<16x128xbf16, #tpu.memory_space<vmem>>) attributes {dimension_semantics = [#tpu.dimension_semantics<parallel>], iteration_bounds = array<i64: 1>, scalar_prefetch = 0 : i64, scratch_operands = 0 : i64, tpu.core_type = #tpu.core_type<tc>, window_params = [{transform_indices = @transform_0, window_bounds = array<i64: 16, 16>}, {pipeline_mode = #tpu.pipeline_mode<synchronous>, transform_indices = @transform_1, window_bounds = array<i64: 16, 128>}, {pipeline_mode = #tpu.pipeline_mode<synchronous>, transform_indices = @transform_2, window_bounds = array<i64: 1, 128>}, {pipeline_mode = #tpu.pipeline_mode<synchronous>, transform_indices = @transform_3, window_bounds = array<i64: 128, 256>}, {pipeline_mode = #tpu.pipeline_mode<synchronous>, transform_indices = @transform_4, window_bounds = array<i64: 1, 256>}, {pipeline_mode = #tpu.pipeline_mode<synchronous>, transform_indices = @transform_5, window_bounds = array<i64: 256, 128>}, {pipeline_mode = #tpu.pipeline_mode<synchronous>, transform_indices = @transform_6, window_bounds = array<i64: 1, 128>}, {transform_indices = @transform_7, window_bounds = array<i64: 16, 128>}]} {
    %c0 = arith.constant 0 : index
    %c0_0 = arith.constant 0 : index
    %0 = vector.load %arg1[%c0, %c0_0] : memref<16x16xf32, #tpu.memory_space<vmem>>, vector<16x16xf32>
    %1 = arith.truncf %0 : vector<16x16xf32> to vector<16x16xbf16>
    %c0_1 = arith.constant 0 : index
    %c0_2 = arith.constant 0 : index
    %2 = vector.load %arg2[%c0_1, %c0_2] : memref<16x128xbf16, #tpu.memory_space<vmem>>, vector<16x128xbf16>
    %cst = arith.constant dense<0.000000e+00> : vector<16x128xf32>
    %3 = tpu.matmul %1, %2, %cst {dimension_numbers = #tpu.dot_dimension_numbers<[1], [0], [0], [1], [0, 0, 1, 1], [], []>} : vector<16x16xbf16>, vector<16x128xbf16>, vector<16x128xf32> -> vector<16x128xf32>
    %c0_3 = arith.constant 0 : index
    %c0_4 = arith.constant 0 : index
    %4 = vector.load %arg3[%c0_3, %c0_4] : memref<1x128xf32, #tpu.memory_space<vmem>>, vector<1x128xf32>
    %5 = vector.broadcast %4 : vector<1x128xf32> to vector<16x128xf32>
    %6 = arith.addf %3, %5 : vector<16x128xf32>
    %cst_5 = arith.constant 0.000000e+00 : f32
    %7 = vector.broadcast %cst_5 : f32 to vector<16x128xf32>
    %8 = arith.maximumf %6, %7 : vector<16x128xf32>
    %9 = arith.truncf %8 : vector<16x128xf32> to vector<16x128xbf16>
    %c0_6 = arith.constant 0 : index
    %c0_7 = arith.constant 0 : index
    %10 = vector.load %arg4[%c0_6, %c0_7] : memref<128x256xbf16, #tpu.memory_space<vmem>>, vector<128x256xbf16>
    %cst_8 = arith.constant dense<0.000000e+00> : vector<16x256xf32>
    %11 = tpu.matmul %9, %10, %cst_8 {dimension_numbers = #tpu.dot_dimension_numbers<[1], [0], [0], [1], [0, 0, 1, 1], [], []>} : vector<16x128xbf16>, vector<128x256xbf16>, vector<16x256xf32> -> vector<16x256xf32>
    %c0_9 = arith.constant 0 : index
    %c0_10 = arith.constant 0 : index
    %12 = vector.load %arg5[%c0_9, %c0_10] : memref<1x256xf32, #tpu.memory_space<vmem>>, vector<1x256xf32>
    %13 = vector.broadcast %12 : vector<1x256xf32> to vector<16x256xf32>
    %14 = arith.addf %11, %13 : vector<16x256xf32>
    %cst_11 = arith.constant 0.000000e+00 : f32
    %15 = vector.broadcast %cst_11 : f32 to vector<16x256xf32>
    %16 = arith.maximumf %14, %15 : vector<16x256xf32>
    %17 = arith.truncf %16 : vector<16x256xf32> to vector<16x256xbf16>
    %c0_12 = arith.constant 0 : index
    %c0_13 = arith.constant 0 : index
    %18 = vector.load %arg6[%c0_12, %c0_13] : memref<256x128xbf16, #tpu.memory_space<vmem>>, vector<256x128xbf16>
    %cst_14 = arith.constant dense<0.000000e+00> : vector<16x128xf32>
    %19 = tpu.matmul %17, %18, %cst_14 {dimension_numbers = #tpu.dot_dimension_numbers<[1], [0], [0], [1], [0, 0, 1, 1], [], []>} : vector<16x256xbf16>, vector<256x128xbf16>, vector<16x128xf32> -> vector<16x128xf32>
    %c0_15 = arith.constant 0 : index
    %c0_16 = arith.constant 0 : index
    %20 = vector.load %arg7[%c0_15, %c0_16] : memref<1x128xf32, #tpu.memory_space<vmem>>, vector<1x128xf32>
    %21 = vector.broadcast %20 : vector<1x128xf32> to vector<16x128xf32>
    %22 = arith.addf %19, %21 : vector<16x128xf32>
    %23 = tpu.iota {dimensions = array<i32: 1>} : vector<16x128xi32>
    %c4_i32 = arith.constant 4 : i32
    %24 = vector.broadcast %c4_i32 : i32 to vector<16x128xi32>
    %25 = arith.cmpi slt, %23, %24 : vector<16x128xi32>
    %cst_17 = arith.constant 0xFF800000 : f32
    %26 = vector.broadcast %cst_17 : f32 to vector<16x128xf32>
    %27 = arith.select %25, %22, %26 : vector<16x128xi1>, vector<16x128xf32>
    %cst_18 = arith.constant dense<0xFF800000> : vector<16xf32>
    %28 = vector.multi_reduction <maximumf>, %27, %cst_18 [1] : vector<16x128xf32> to vector<16xf32>
    %29 = vector.shape_cast %28 : vector<16xf32> to vector<16x1xf32>
    %30 = vector.broadcast %29 : vector<16x1xf32> to vector<16x128xf32>
    %31 = arith.subf %27, %30 : vector<16x128xf32>
    %32 = math.exp %31 : vector<16x128xf32>
    %cst_19 = arith.constant dense<0.000000e+00> : vector<16xf32>
    %33 = vector.multi_reduction <add>, %32, %cst_19 [1] : vector<16x128xf32> to vector<16xf32>
    %34 = vector.shape_cast %33 : vector<16xf32> to vector<16x1xf32>
    %35 = vector.broadcast %34 : vector<16x1xf32> to vector<16x128xf32>
    %36 = arith.divf %32, %35 : vector<16x128xf32>
    %c4_i32_20 = arith.constant 4 : i32
    %37 = vector.broadcast %c4_i32_20 : i32 to vector<16x128xi32>
    %38 = arith.cmpi eq, %23, %37 : vector<16x128xi32>
    %39 = arith.select %38, %22, %36 : vector<16x128xi1>, vector<16x128xf32>
    %40 = arith.truncf %39 : vector<16x128xf32> to vector<16x128xbf16>
    %c0_21 = arith.constant 0 : index
    %c0_22 = arith.constant 0 : index
    %41 = vector.load %arg8[%c0_21, %c0_22] : memref<16x128xbf16, #tpu.memory_space<vmem>>, vector<16x128xbf16>
    tpu.vector_store %arg8[%c0_21, %c0_22], %40 {strides = array<i32>} : memref<16x128xbf16, #tpu.memory_space<vmem>>, vector<16x128xbf16>,
    return
  }
  func.func @transform_0(%arg0: i32) -> (i32, i32) {
    %c0_i32 = arith.constant 0 : i32
    %c0_i32_0 = arith.constant 0 : i32
    return %arg0, %c0_i32 : i32, i32
  }
  func.func @transform_1(%arg0: i32) -> (i32, i32) {
    %c0_i32 = arith.constant 0 : i32
    %c0_i32_0 = arith.constant 0 : i32
    %c0_i32_1 = arith.constant 0 : i32
    return %c0_i32, %c0_i32_0 : i32, i32
  }
  func.func @transform_2(%arg0: i32) -> (i32, i32) {
    %c0_i32 = arith.constant 0 : i32
    %c0_i32_0 = arith.constant 0 : i32
    %c0_i32_1 = arith.constant 0 : i32
    return %c0_i32, %c0_i32_0 : i32, i32
  }
  func.func @transform_3(%arg0: i32) -> (i32, i32) {
    %c0_i32 = arith.constant 0 : i32
    %c0_i32_0 = arith.constant 0 : i32
    %c0_i32_1 = arith.constant 0 : i32
    return %c0_i32, %c0_i32_0 : i32, i32
  }
  func.func @transform_4(%arg0: i32) -> (i32, i32) {
    %c0_i32 = arith.constant 0 : i32
    %c0_i32_0 = arith.constant 0 : i32
    %c0_i32_1 = arith.constant 0 : i32
    return %c0_i32, %c0_i32_0 : i32, i32
  }
  func.func @transform_5(%arg0: i32) -> (i32, i32) {
    %c0_i32 = arith.constant 0 : i32
    %c0_i32_0 = arith.constant 0 : i32
    %c0_i32_1 = arith.constant 0 : i32
    return %c0_i32, %c0_i32_0 : i32, i32
  }
  func.func @transform_6(%arg0: i32) -> (i32, i32) {
    %c0_i32 = arith.constant 0 : i32
    %c0_i32_0 = arith.constant 0 : i32
    %c0_i32_1 = arith.constant 0 : i32
    return %c0_i32, %c0_i32_0 : i32, i32
  }
  func.func @transform_7(%arg0: i32) -> (i32, i32) {
    %c0_i32 = arith.constant 0 : i32
    %c0_i32_0 = arith.constant 0 : i32
    return %arg0, %c0_i32 : i32, i32
  }
}

</mosaic_0001>

<llo_original>
// kernel: actor_critic_forward.1
$region0: #{actor_critic_forward.1}
  #allocation0 [shape = 'u32[]', space=smem, size = 0x4, offset = 0x4, fixed_abs, tag = 'smem constant byte address 0x4 - core index']
  #allocation1 [shape = 'u32[72,128]{1,0:T(1,128)}', space=vmem, size = 0x9000, scoped, tag = 'internal scratch']
  %s0 = inlined_call_operand.vmem [shape: f32[16,16], index: 0, kind: input, shape index: {}]
  %s1 = inlined_call_operand.vmem [shape: bf16[16,128], index: 1, kind: input, shape index: {}]
  %s2 = inlined_call_operand.vmem [shape: f32[1,128], index: 2, kind: input, shape index: {}]
  %s3 = inlined_call_operand.hbm [shape: bf16[128,256], index: 3, kind: input, shape index: {}]
  %s4 = inlined_call_operand.vmem [shape: f32[1,256], index: 4, kind: input, shape index: {}]
  %s5 = inlined_call_operand.hbm [shape: bf16[256,128], index: 5, kind: input, shape index: {}]
  %s6 = inlined_call_operand.vmem [shape: f32[1,128], index: 6, kind: input, shape index: {}]
  %s7 = inlined_call_operand.vmem [shape: bf16[16,128], index: 7, kind: output, shape index: {}]
  %s8 = sld [smem:[#allocation0]]
  $region46: #{actor_critic_forward.1} parent=0
    _
  %s10 = ssub.s32 1, %s8
  %s11 = scalar_select 0, %s10, %s8
  $region1: #{actor_critic_forward.1} parent=0
    #allocation2 [shape = 'u8[65536]{0}', space=vmem, size = 0x10000, scoped, tag = 'input window, operand 3, single buffered']
    #allocation3 [shape = 's32[1]{0}', space=sflag, size = 0x4, scoped, tag = 'scoped memory for actor_critic_forward.1']
    #allocation4 [shape = 'u8[65536]{0}', space=vmem, size = 0x10000, scoped, tag = 'input window, operand 5, single buffered']
    #allocation5 [shape = 's32[1]{0}', space=sflag, size = 0x4, scoped, tag = 'scoped memory for actor_critic_forward.1']
    %12 = vsyncpa [#allocation3], 0
    %13 = vsyncpa [#allocation5], 0
    // Predicated region
    $region2: #{actor_critic_forward.1} parent=1 // pred_check
      _
    $region3: #{actor_critic_forward.1} parent=1 // pred_check_branch
      %15 = sbr.rel (0) target = $region5
    $region4: #{actor_critic_forward.1} parent=1 // pred_region
      _
    $region5: #{actor_critic_forward.1} parent=1 // pred_fallthru
      _
    // Predicated region
    $region6: #{actor_critic_forward.1} parent=1 // pred_check
      _
    $region7: #{actor_critic_forward.1} parent=1 // pred_check_branch
      %17 = sbr.rel (0) target = $region9
    $region8: #{actor_critic_forward.1} parent=1 // pred_region
      _
    $region9: #{actor_critic_forward.1} parent=1 // pred_fallthru
      _
    // Predicated region
    $region10: #{actor_critic_forward.1} parent=1 // pred_check
      _
    $region11: #{actor_critic_forward.1} parent=1 // pred_check_branch
      %19 = sbr.rel (0) target = $region13
    $region12: #{actor_critic_forward.1} parent=1 // pred_region
      _
    $region13: #{actor_critic_forward.1} parent=1 // pred_fallthru
      _
    // Predicated region
    $region14: #{actor_critic_forward.1} parent=1 // pred_check
      _
    $region15: #{actor_critic_forward.1} parent=1 // pred_check_branch
      %21 = sbr.rel (0) target = $region17
    $region16: #{actor_critic_forward.1} parent=1 // pred_region
      %23 = vsyncadd [#allocation3], 0
      %s24 = sshll.u32 %s3, 4
      %s25 = int_to_ptr.hbm [resolvable:$true] %s24
      %s26 = sshll.u32 [#allocation2], 4
      %s27 = int_to_ptr.vmem [resolvable:$true] %s26
      %32 = dma.hbm_to_vmem [thread:$0]  %s25, 2048, %s27, [#allocation3], 128, 128, 8
    $region17: #{actor_critic_forward.1} parent=1 // pred_fallthru
      _
    // Predicated region
    $region18: #{actor_critic_forward.1} parent=1 // pred_check
      _
    $region19: #{actor_critic_forward.1} parent=1 // pred_check_branch
      %34 = sbr.rel (0) target = $region21
    $region20: #{actor_critic_forward.1} parent=1 // pred_region
      _
    $region21: #{actor_critic_forward.1} parent=1 // pred_fallthru
      _
    // Predicated region
    $region22: #{actor_critic_forward.1} parent=1 // pred_check
      _
    $region23: #{actor_critic_forward.1} parent=1 // pred_check_branch
      %36 = sbr.rel (0) target = $region25
    $region24: #{actor_critic_forward.1} parent=1 // pred_region
      %38 = vsyncadd [#allocation5], 0
      %s39 = sshll.u32 %s5, 4
      %s40 = int_to_ptr.hbm [resolvable:$true] %s39
      %s41 = sshll.u32 [#allocation4], 4
      %s42 = int_to_ptr.vmem [resolvable:$true] %s41
      %47 = dma.hbm_to_vmem [thread:$0]  %s40, 2048, %s42, [#allocation5], 64, 64, 4
    $region25: #{actor_critic_forward.1} parent=1 // pred_fallthru
      _
    // Predicated region
    $region26: #{actor_critic_forward.1} parent=1 // pred_check
      _
    $region27: #{actor_critic_forward.1} parent=1 // pred_check_branch
      %49 = sbr.rel (0) target = $region29
    $region28: #{actor_critic_forward.1} parent=1 // pred_region
      _
    $region29: #{actor_critic_forward.1} parent=1 // pred_fallthru
      _
    // Predicated region
    $region30: #{actor_critic_forward.1} parent=1 // pred_check
      _
    $region31: #{actor_critic_forward.1} parent=1 // pred_check_branch
      %51 = sbr.rel (0) target = $region33
    $region32: #{actor_critic_forward.1} parent=1 // pred_region
      %53 = dma.done [#allocation3], 2048
    $region33: #{actor_critic_forward.1} parent=1 // pred_fallthru
      _
    // Predicated region
    $region34: #{actor_critic_forward.1} parent=1 // pred_check
      _
    $region35: #{actor_critic_forward.1} parent=1 // pred_check_branch
      %55 = sbr.rel (0) target = $region37
    $region36: #{actor_critic_forward.1} parent=1 // pred_region
      %57 = dma.done [#allocation5], 2048
    $region37: #{actor_critic_forward.1} parent=1 // pred_fallthru
      _
    %v59 = vld [vmem:[%s0] sm:$0xff]
    %v60 = vld [vmem:[%s0 + $0x8] sm:$0xff]
    %v61 = vpack.c.bf16 %v60, %v59
    %v62 = vld [vmem:[%s1] sm:$0xf]
    %v63 = vld [vmem:[%s1 + $0x4] sm:$0xf]
    %v64 = vld [vmem:[%s2] sm:$0x1]
    %v66 = vperm.slane %v64, 0
    %v70 = vunpack.c.l.b16 %v62
    %v71 = vunpack.c.l.b16 %v63
    %v72 = vpack.c.b16 %v71, %v70
    %vm74 = vcmask 130048
    %v76 = vsel %vm74, %v61, 0
    %78 = vmatpush.bf16.msra.mxu0 0
    %79 = vmatpush.bf16.msra.mxu0 0
    %80 = vmatpush.bf16.msra.mxu0 0
    %81 = vmatpush.bf16.msra.mxu0 0
    %82 = vmatpush.bf16.msra.mxu0 0
    %83 = vmatpush.bf16.msra.mxu0 0
    %84 = vmatpush.bf16.msra.mxu0 0
    %85 = vmatpush.bf16.msra.mxu0 %v72
    %86 = vmatmul.bf16.gmra.mxu0 %v76
    %v87 = vpop.f32.mrf.mxu0
    %v88 = vadd.f32 %v66, %v87
    %v89 = vpop.f32.mrf.mxu0
    %v90 = vadd.f32 %v66, %v89
    %91 = vdwg.mxu0
    %v92 = vmax.f32 %v88, 0.0
    %v93 = vmax.f32 %v90, 0.0
    %v94 = vpack.c.bf16 %v93, %v92
    %v95 = vld [vmem:[#allocation2] sm:$0xff]
    %v96 = vld [vmem:[#allocation2 + $0x8] sm:$0xff]
    %v97 = vld [vmem:[#allocation2 + $0x10] sm:$0xff]
    %v98 = vld [vmem:[#allocation2 + $0x18] sm:$0xff]
    %v99 = vld [vmem:[#allocation2 + $0x20] sm:$0xff]
    %v100 = vld [vmem:[#allocation2 + $0x28] sm:$0xff]
    %v101 = vld [vmem:[#allocation2 + $0x30] sm:$0xff]
    %v102 = vld [vmem:[#allocation2 + $0x38] sm:$0xff]
    %v103 = vld [vmem:[#allocation2 + $0x40] sm:$0xff]
    %v104 = vld [vmem:[#allocation2 + $0x48] sm:$0xff]
    %v105 = vld [vmem:[#allocation2 + $0x50] sm:$0xff]
    %v106 = vld [vmem:[#allocation2 + $0x58] sm:$0xff]
    %v107 = vld [vmem:[#allocation2 + $0x60] sm:$0xff]
    %v108 = vld [vmem:[#allocation2 + $0x68] sm:$0xff]
    %v109 = vld [vmem:[#allocation2 + $0x70] sm:$0xff]
    %v110 = vld [vmem:[#allocation2 + $0x78] sm:$0xff]
    %v111 = vld [vmem:[%s4] sm:$0x3]
    %v113 = vperm.slane %v111, 0
    %v114 = vperm.slane %v111, 1
    %v133 = vunpack.c.l.b16 %v95
    %v134 = vunpack.c.h.b16 %v95
    %v135 = vunpack.c.l.b16 %v96
    %v136 = vunpack.c.h.b16 %v96
    %v137 = vunpack.c.l.b16 %v97
    %v138 = vunpack.c.h.b16 %v97
    %v139 = vunpack.c.l.b16 %v98
    %v140 = vunpack.c.h.b16 %v98
    %v141 = vunpack.c.l.b16 %v99
    %v142 = vunpack.c.h.b16 %v99
    %v143 = vunpack.c.l.b16 %v100
    %v144 = vunpack.c.h.b16 %v100
    %v145 = vunpack.c.l.b16 %v101
    %v146 = vunpack.c.h.b16 %v101
    %v147 = vunpack.c.l.b16 %v102
    %v148 = vunpack.c.h.b16 %v102
    %v149 = vunpack.c.l.b16 %v103
    %v150 = vunpack.c.h.b16 %v103
    %v151 = vunpack.c.l.b16 %v104
    %v152 = vunpack.c.h.b16 %v104
    %v153 = vunpack.c.l.b16 %v105
    %v154 = vunpack.c.h.b16 %v105
    %v155 = vunpack.c.l.b16 %v106
    %v156 = vunpack.c.h.b16 %v106
    %v157 = vunpack.c.l.b16 %v107
    %v158 = vunpack.c.h.b16 %v107
    %v159 = vunpack.c.l.b16 %v108
    %v160 = vunpack.c.h.b16 %v108
    %v161 = vunpack.c.l.b16 %v109
    %v162 = vunpack.c.h.b16 %v109
    %v163 = vunpack.c.l.b16 %v110
    %v164 = vunpack.c.h.b16 %v110
    %v165 = vpack.c.b16 %v135, %v133
    %v166 = vpack.c.b16 %v136, %v134
    %v167 = vpack.c.b16 %v139, %v137
    %v168 = vpack.c.b16 %v140, %v138
    %v169 = vpack.c.b16 %v143, %v141
    %v170 = vpack.c.b16 %v144, %v142
    %v171 = vpack.c.b16 %v147, %v145
    %v172 = vpack.c.b16 %v148, %v146
    %v173 = vpack.c.b16 %v151, %v149
    %v174 = vpack.c.b16 %v152, %v150
    %v175 = vpack.c.b16 %v155, %v153
    %v176 = vpack.c.b16 %v156, %v154
    %v177 = vpack.c.b16 %v159, %v157
    %v178 = vpack.c.b16 %v160, %v158
    %v179 = vpack.c.b16 %v163, %v161
    %v180 = vpack.c.b16 %v164, %v162
    %197 = vmatpush.bf16.msra.mxu0 %v179
    %198 = vmatpush.bf16.msra.mxu0 %v177
    %199 = vmatpush.bf16.msra.mxu0 %v175
    %200 = vmatpush.bf16.msra.mxu0 %v173
    %201 = vmatpush.bf16.msra.mxu0 %v171
    %202 = vmatpush.bf16.msra.mxu0 %v169
    %203 = vmatpush.bf16.msra.mxu0 %v167
    %204 = vmatpush.bf16.msra.mxu0 %v165
    %205 = vmatmul.bf16.gmra.mxu0 %v94
    %v206 = vpop.f32.mrf.mxu0
    %v207 = vadd.f32 %v113, %v206
    %v208 = vpop.f32.mrf.mxu0
    %v209 = vadd.f32 %v113, %v208
    %210 = vdwg.mxu0
    %211 = vmatpush.bf16.msra.mxu0 %v180
    %212 = vmatpush.bf16.msra.mxu0 %v178
    %213 = vmatpush.bf16.msra.mxu0 %v176
    %214 = vmatpush.bf16.msra.mxu0 %v174
    %215 = vmatpush.bf16.msra.mxu0 %v172
    %216 = vmatpush.bf16.msra.mxu0 %v170
    %217 = vmatpush.bf16.msra.mxu0 %v168
    %218 = vmatpush.bf16.msra.mxu0 %v166
    %219 = vmatmul.bf16.gmra.mxu0 %v94
    %v220 = vpop.f32.mrf.mxu0
    %v221 = vadd.f32 %v114, %v220
    %v222 = vpop.f32.mrf.mxu0
    %v223 = vadd.f32 %v114, %v222
    %224 = vdwg.mxu0
    %v225 = vmax.f32 %v207, 0.0
    %v226 = vmax.f32 %v221, 0.0
    %v227 = vmax.f32 %v209, 0.0
    %v228 = vmax.f32 %v223, 0.0
    %v229 = vpack.c.bf16 %v227, %v225
    %v230 = vpack.c.bf16 %v228, %v226
    %v231 = vld [vmem:[#allocation4] sm:$0xf]
    %v232 = vld [vmem:[#allocation4 + $0x4] sm:$0xf]
    %v233 = vld [vmem:[#allocation4 + $0x8] sm:$0xf]
    %v234 = vld [vmem:[#allocation4 + $0xc] sm:$0xf]
    %v235 = vld [vmem:[#allocation4 + $0x10] sm:$0xf]
    %v236 = vld [vmem:[#allocation4 + $0x14] sm:$0xf]
    %v237 = vld [vmem:[#allocation4 + $0x18] sm:$0xf]
    %v238 = vld [vmem:[#allocation4 + $0x1c] sm:$0xf]
    %v239 = vld [vmem:[#allocation4 + $0x20] sm:$0xf]
    %v240 = vld [vmem:[#allocation4 + $0x24] sm:$0xf]
    %v241 = vld [vmem:[#allocation4 + $0x28] sm:$0xf]
    %v242 = vld [vmem:[#allocation4 + $0x2c] sm:$0xf]
    %v243 = vld [vmem:[#allocation4 + $0x30] sm:$0xf]
    %v244 = vld [vmem:[#allocation4 + $0x34] sm:$0xf]
    %v245 = vld [vmem:[#allocation4 + $0x38] sm:$0xf]
    %v246 = vld [vmem:[#allocation4 + $0x3c] sm:$0xf]
    %v247 = vld [vmem:[#allocation4 + $0x40] sm:$0xf]
    %v248 = vld [vmem:[#allocation4 + $0x44] sm:$0xf]
    %v249 = vld [vmem:[#allocation4 + $0x48] sm:$0xf]
    %v250 = vld [vmem:[#allocation4 + $0x4c] sm:$0xf]
    %v251 = vld [vmem:[#allocation4 + $0x50] sm:$0xf]
    %v252 = vld [vmem:[#allocation4 + $0x54] sm:$0xf]
    %v253 = vld [vmem:[#allocation4 + $0x58] sm:$0xf]
    %v254 = vld [vmem:[#allocation4 + $0x5c] sm:$0xf]
    %v255 = vld [vmem:[#allocation4 + $0x60] sm:$0xf]
    %v256 = vld [vmem:[#allocation4 + $0x64] sm:$0xf]
    %v257 = vld [vmem:[#allocation4 + $0x68] sm:$0xf]
    %v258 = vld [vmem:[#allocation4 + $0x6c] sm:$0xf]
    %v259 = vld [vmem:[#allocation4 + $0x70] sm:$0xf]
    %v260 = vld [vmem:[#allocation4 + $0x74] sm:$0xf]
    %v261 = vld [vmem:[#allocation4 + $0x78] sm:$0xf]
    %v262 = vld [vmem:[#allocation4 + $0x7c] sm:$0xf]
    %v263 = vld [vmem:[%s6] sm:$0x1]
    %v265 = vperm.slane %v263, 0
    %v299 = vunpack.c.l.b16 %v231
    %v300 = vunpack.c.l.b16 %v232
    %v301 = vunpack.c.l.b16 %v233
    %v302 = vunpack.c.l.b16 %v234
    %v303 = vunpack.c.l.b16 %v235
    %v304 = vunpack.c.l.b16 %v236
    %v305 = vunpack.c.l.b16 %v237
    %v306 = vunpack.c.l.b16 %v238
    %v307 = vunpack.c.l.b16 %v239
    %v308 = vunpack.c.l.b16 %v240
    %v309 = vunpack.c.l.b16 %v241
    %v310 = vunpack.c.l.b16 %v242
    %v311 = vunpack.c.l.b16 %v243
    %v312 = vunpack.c.l.b16 %v244
    %v313 = vunpack.c.l.b16 %v245
    %v314 = vunpack.c.l.b16 %v246
    %v315 = vunpack.c.l.b16 %v247
    %v316 = vunpack.c.l.b16 %v248
    %v317 = vunpack.c.l.b16 %v249
    %v318 = vunpack.c.l.b16 %v250
    %v319 = vunpack.c.l.b16 %v251
    %v320 = vunpack.c.l.b16 %v252
    %v321 = vunpack.c.l.b16 %v253
    %v322 = vunpack.c.l.b16 %v254
    %v323 = vunpack.c.l.b16 %v255
    %v324 = vunpack.c.l.b16 %v256
    %v325 = vunpack.c.l.b16 %v257
    %v326 = vunpack.c.l.b16 %v258
    %v327 = vunpack.c.l.b16 %v259
    %v328 = vunpack.c.l.b16 %v260
    %v329 = vunpack.c.l.b16 %v261
    %v330 = vunpack.c.l.b16 %v262
    %v331 = vpack.c.b16 %v300, %v299
    %v332 = vpack.c.b16 %v302, %v301
    %v333 = vpack.c.b16 %v304, %v303
    %v334 = vpack.c.b16 %v306, %v305
    %v335 = vpack.c.b16 %v308, %v307
    %v336 = vpack.c.b16 %v310, %v309
    %v337 = vpack.c.b16 %v312, %v311
    %v338 = vpack.c.b16 %v314, %v313
    %v339 = vpack.c.b16 %v316, %v315
    %v340 = vpack.c.b16 %v318, %v317
    %v341 = vpack.c.b16 %v320, %v319
    %v342 = vpack.c.b16 %v322, %v321
    %v343 = vpack.c.b16 %v324, %v323
    %v344 = vpack.c.b16 %v326, %v325
    %v345 = vpack.c.b16 %v328, %v327
    %v346 = vpack.c.b16 %v330, %v329
    %363 = vmatpush.bf16.msra.mxu0 %v338
    %364 = vmatpush.bf16.msra.mxu0 %v337
    %365 = vmatpush.bf16.msra.mxu0 %v336
    %366 = vmatpush.bf16.msra.mxu0 %v335
    %367 = vmatpush.bf16.msra.mxu0 %v334
    %368 = vmatpush.bf16.msra.mxu0 %v333
    %369 = vmatpush.bf16.msra.mxu0 %v332
    %370 = vmatpush.bf16.msra.mxu0 %v331
    %371 = vmatmul.bf16.gmra.mxu0 %v229
    %v372 = vpop.f32.mrf.mxu0
    %v373 = vadd.f32 %v265, %v372
    %v374 = vpop.f32.mrf.mxu0
    %v375 = vadd.f32 %v265, %v374
    %376 = vdwg.mxu0
    %377 = vmatpush.bf16.msra.mxu0 %v346
    %378 = vmatpush.bf16.msra.mxu0 %v345
    %379 = vmatpush.bf16.msra.mxu0 %v344
    %380 = vmatpush.bf16.msra.mxu0 %v343
    %381 = vmatpush.bf16.msra.mxu0 %v342
    %382 = vmatpush.bf16.msra.mxu0 %v341
    %383 = vmatpush.bf16.msra.mxu0 %v340
    %384 = vmatpush.bf16.msra.mxu0 %v339
    %385 = vmatmul.bf16.gmra.mxu0 %v230
    %v386 = vpop.f32.mrf.mxu0
    %v387 = vadd.f32 %v373, %v386
    %v388 = vpop.f32.mrf.mxu0
    %v389 = vadd.f32 %v375, %v388
    %390 = vdwg.mxu0
    %v391 = vlaneseq
    %v392 = vand.u32 %v391, 127
    %vm393 = vcmp.lt.s32.totalorder %v392, 4
    %v394 = vsel %vm393, %v387, -inf
    %v395 = vsel %vm393, %v389, -inf
    %396 = vmax.xlane.f32.xlu0 %v394
    %v397 = vpop.xlane.xlu0 %396
    %398 = vmax.xlane.f32.xlu0 %v395
    %v399 = vpop.xlane.xlu0 %398
    %v400 = vsub.f32 %v394, %v397
    %v401 = vsub.f32 %v395, %v399
    %v402 = vmul.f32 %v400, 1.442695
    %v403 = vpow.pop %v402
    %v404 = vmul.f32 %v401, 1.442695
    %v405 = vpow.pop %v404
    %406 = vadd.xlane.f32.xlu0 %v403
    %v407 = vpop.xlane.xlu0 %406
    %408 = vadd.xlane.f32.xlu0 %v405
    %v409 = vpop.xlane.xlu0 %408
    %v410 = vrcp.pop %v407
    %v411 = vmul.f32 %v407, %v410
    %v412 = vsub.f32 1.0, %v411
    %v413 = vmul.f32 %v410, %v412
    %v414 = vadd.f32 %v410, %v413
    %vm415 = vweird.f32 %v407
    %vm416 = vweird.f32 %v410
    %vm417 = vmor %vm415, %vm416
    %v418 = vsel %vm417, %v410, %v414
    %v419 = vand.u32 2147483647, %v407
    %vm420 = vcmp.eq.f32.partialorder %v419, 8.507059e+37
    %v421 = vand.u32 %v407, 2147483648
    %v422 = vor.u32 1.1754944e-38, %v421
    %v423 = vsel %vm420, %v422, %v418
    %v424 = vmul.f32 %v403, %v423
    %v425 = vrcp.pop %v409
    %v426 = vmul.f32 %v409, %v425
    %v427 = vsub.f32 1.0, %v426
    %v428 = vmul.f32 %v425, %v427
    %v429 = vadd.f32 %v425, %v428
    %vm430 = vweird.f32 %v409
    %vm431 = vweird.f32 %v425
    %vm432 = vmor %vm430, %vm431
    %v433 = vsel %vm432, %v425, %v429
    %v434 = vand.u32 2147483647, %v409
    %vm435 = vcmp.eq.f32.partialorder %v434, 8.507059e+37
    %v436 = vand.u32 %v409, 2147483648
    %v437 = vor.u32 1.1754944e-38, %v436
    %v438 = vsel %vm435, %v437, %v433
    %v439 = vmul.f32 %v405, %v438
    %vm440 = vcmp.eq.s32.totalorder %v392, 4
    %v441 = vsel %vm440, %v387, %v424
    %v442 = vsel %vm440, %v389, %v439
    %v443 = vpack.c.bf16 %v441, %v441
    %v444 = vpack.c.bf16 %v442, %v442
    %445 = vst [vmem:[%s7] sm:$0xf] %v443
    %446 = vst [vmem:[%s7 + $0x4] sm:$0xf] %v444
    // Predicated region
    $region38: #{actor_critic_forward.1} parent=1 // pred_check
      _
    $region39: #{actor_critic_forward.1} parent=1 // pred_check_branch
      %448 = sbr.rel (0) target = $region41
    $region40: #{actor_critic_forward.1} parent=1 // pred_region
      _
    $region41: #{actor_critic_forward.1} parent=1 // pred_fallthru
      _
    // Predicated region
    $region42: #{actor_critic_forward.1} parent=1 // pred_check
      _
    $region43: #{actor_critic_forward.1} parent=1 // pred_check_branch
      %450 = sbr.rel (0) target = $region45
    $region44: #{actor_critic_forward.1} parent=1 // pred_region
      _
    $region45: #{actor_critic_forward.1} parent=1 // pred_fallthru
      _
    %451 = vsyncpa [#allocation3], 1
    %452 = vsyncpa [#allocation5], 1

</llo_original>
